<compile_context>
chip_gen: v7x
topology: tpu7x:2x2x1
jax: 0.10.0
libtpu: 0.0.40
codegen_flags: <defaults>
</compile_context>

<pallas_src>
import functools

import jax
import jax.numpy as jnp
from jax.experimental import pallas as pl
from jax.experimental.pallas import tpu as pltpu


def _round_up(x, m):
    return ((x + m - 1) // m) * m


def _proxynca_kernel(*refs, scale2, eps, use_mask, mxu_dtype):
    if use_mask:
        x_ref, p_ref, t_ref, bias_ref, out_ref = refs
    else:
        x_ref, p_ref, t_ref, out_ref = refs

    x = x_ref[...].astype(jnp.float32)                      # (TB, Ep)

    # F.normalize(X, p=2, dim=-1, eps) * scale, with the distance->logit
    # factor 2 folded into the scale:  logits = <(2*scale)*xhat, scale*phat>.
    eps2 = jnp.float32(eps * eps)
    inv_x = jax.lax.rsqrt(jnp.maximum(jnp.sum(x * x, axis=-1, keepdims=True), eps2))
    xn = (x * (jnp.float32(scale2) * inv_x)).astype(mxu_dtype)   # (TB, Ep)

    # Proxies arrive pre-normalized, pre-scaled, transposed (Ep, Cp) and
    # already in mxu_dtype -> plain row-major MXU matmul, f32 accumulation.
    logits = jax.lax.dot_general(
        xn, p_ref[...], (((1,), (0,)), ((), ())),
        preferred_element_type=jnp.float32)                  # (TB, Cp)

    if use_mask:
        # 0 for real classes, -1e30 for lane-padding classes (exp underflows
        # to 0; padded T entries are exact zeros so 0 * (-1e30) stays 0).
        logits = logits + bias_ref[...]

    t = t_ref[...].astype(jnp.float32)                       # (TB, Cp)

    # Fused log_softmax + weighted reduction:
    #   sum_j T_ij*(logsumexp_i - logits_ij) = logsumexp_i*sum_j T_ij - sum_j T_ij*logits_ij
    m = jnp.max(logits, axis=-1, keepdims=True)
    e = jnp.exp(logits - m)   # TODO(synk): bf16 exp on v6e/v7x EUP (keep f32 on v5e)
    lse = m + jnp.log(jnp.sum(e, axis=-1, keepdims=True))
    sum_t = jnp.sum(t, axis=-1, keepdims=True)
    sum_tl = jnp.sum(t * logits, axis=-1, keepdims=True)
    per_sample = lse * sum_t - sum_tl                        # (TB, 1)

    # Lane-dense store of the per-sample partial losses.
    out_ref[...] = jnp.broadcast_to(per_sample, out_ref.shape)


def _vmem_capacity_bytes():
    """Per-generation VMEM capacity (v5e/v6e: 128 MiB, v7x: 64 MiB per core)."""
    try:
        info = pltpu.get_tpu_info()
        cap = getattr(info, "vmem_capacity_bytes", None)
        if cap:
            return int(cap)
    except Exception:
        pass
    return 64 * 1024 * 1024  # conservative fallback (v7x per-TC physical)


def _footprint_bytes(tb, Cp, Ep, io_bytes, mxu_bytes, use_mask):
    b = Cp * Ep * mxu_bytes          # proxies^T (single-buffered, resident)
    b += 2 * tb * Ep * io_bytes      # X tile (double-buffered)
    b += 2 * tb * Cp * io_bytes      # T tile (double-buffered)
    b += 2 * tb * 128 * 4            # out tile (double-buffered)
    if use_mask:
        b += 8 * Cp * 4              # mask row (sublane-padded)
    return b


def _resident_spec(block_shape, index_map):
    """BlockSpec for a grid-invariant block; single-buffered when supported."""
    try:
        return pl.BlockSpec(block_shape, index_map, pipeline_mode=pl.Buffered(1))
    except Exception:
        return pl.BlockSpec(block_shape, index_map)


def proxynca_prob_orig_softlabel_loss(X, proxies, T, scale, *,
                                      mxu_dtype=jnp.bfloat16, eps=1e-12):
    """Pallas implementation of ProxyNCA_prob_orig_softlabel.forward."""
    N, E = X.shape
    C, E2 = proxies.shape
    assert E == E2 and T.shape == (N, C)

    f32 = jnp.float32
    io_dtype = mxu_dtype            # streaming dtype for X / T
    Ep = _round_up(E, 128)          # lane-dense contraction dim
    Cp = _round_up(C, 128)          # lane-dense class dim
    Np8 = _round_up(N, 8)           # sublane-aligned batch
    use_mask = (Cp != C)

    io_bytes = jnp.dtype(io_dtype).itemsize
    mxu_bytes = jnp.dtype(mxu_dtype).itemsize

    # Size the batch tile and the VMEM limit from the actual block footprint.
    budget = int(_vmem_capacity_bytes() * 0.85)
    TB = 8
    for cand in (256, 128, 64, 32, 16, 8):
        if cand <= Np8 and _footprint_bytes(cand, Cp, Ep, io_bytes, mxu_bytes,
                                            use_mask) <= budget:
            TB = cand
            break
    # TODO(synk): if even TB=8 overflows the budget (huge nb_classes), fall back
    # to a class-axis grid with an online log-softmax accumulator.
    Np = _round_up(Np8, TB)

    vmem_limit = _footprint_bytes(TB, Cp, Ep, io_bytes, mxu_bytes, use_mask)
    vmem_limit = min(max(vmem_limit + (8 << 20), 32 << 20), budget)

    # --- hoisted, one-shot proxy prep (wrapper, not per batch tile) ---------
    P32 = proxies.astype(f32)
    inv_p = jax.lax.rsqrt(jnp.maximum(jnp.sum(P32 * P32, -1, keepdims=True),
                                      jnp.float32(eps * eps)))
    Pn = P32 * (jnp.float32(scale) * inv_p)                          # (C, E)
    PnT = jnp.pad(Pn, ((0, Cp - C), (0, Ep - E))).T.astype(mxu_dtype)  # (Ep, Cp)

    Xp = jnp.pad(X.astype(f32), ((0, Np - N), (0, Ep - E))).astype(io_dtype)
    Tp = jnp.pad(T.astype(f32), ((0, Np - N), (0, Cp - C))).astype(io_dtype)

    in_specs = [
        pl.BlockSpec((TB, Ep), lambda b: (b, 0)),        # X tile
        _resident_spec((Ep, Cp), lambda b: (0, 0)),      # proxies^T (resident)
        pl.BlockSpec((TB, Cp), lambda b: (b, 0)),        # T tile
    ]
    args = [Xp, PnT, Tp]
    if use_mask:
        mask_row = jnp.where(jnp.arange(Cp) < C, 0.0, -1e30).astype(f32).reshape(1, Cp)
        in_specs.append(_resident_spec((1, Cp), lambda b: (0, 0)))
        args.append(mask_row)

    kernel = functools.partial(_proxynca_kernel, scale2=2.0 * float(scale),
                               eps=float(eps), use_mask=use_mask,
                               mxu_dtype=mxu_dtype)

    per_sample = pl.pallas_call(
        kernel,
        out_shape=jax.ShapeDtypeStruct((Np, 128), jnp.float32),
        grid_spec=pltpu.PrefetchScalarGridSpec(
            num_scalar_prefetch=0,
            grid=(Np // TB,),
            in_specs=in_specs,
            out_specs=pl.BlockSpec((TB, 128), lambda b: (b, 0)),
        ),
        compiler_params=pltpu.CompilerParams(
            dimension_semantics=("parallel",),   # batch tiles shard across TCs (v7x)
            vmem_limit_bytes=vmem_limit,
        ),
    )(*args)

    # Padded batch rows carry T == 0 -> contribute exactly 0; mean over real N.
    return jnp.sum(per_sample[:, 0]) / jnp.float32(N)


def _reference_loss(X, P, T, scale, eps=1e-12):
    """Faithful (un-optimized) JAX transcription of the PyTorch module."""
    Pn = scale * P / jnp.maximum(jnp.linalg.norm(P, axis=-1, keepdims=True), eps)
    Xn = scale * X / jnp.maximum(jnp.linalg.norm(X, axis=-1, keepdims=True), eps)
    d2 = (jnp.sum(Xn * Xn, -1, keepdims=True)
          + jnp.sum(Pn * Pn, -1)[None, :]
          - 2.0 * Xn @ Pn.T)
    d = jnp.where(d2 > 0.0, d2, 0.0)
    log_sm = jax.nn.log_softmax(-d, axis=-1)
    return jnp.mean(jnp.sum(-T * log_sm, axis=-1))


if __name__ == "__main__":
    nb_classes, sz_embed, scale = 16, 32, 3.0
    batch = 8

    key = jax.random.PRNGKey(0)
    kp, kx, kt = jax.random.split(key, 3)

    # Deterministic parameter init (torch.randn(nb_classes, sz_embed) / 8).
    proxies = jax.random.normal(kp, (nb_classes, sz_embed), jnp.float32) / 8.0
    X = jax.random.normal(kx, (batch, sz_embed), jnp.float32)
    # Soft labels T: each row a probability distribution over classes.
    T = jax.nn.softmax(jax.random.normal(kt, (batch, nb_classes), jnp.float32), -1)
    indices = jnp.arange(batch)  # unused by the forward pass (API parity only)

    ref = _reference_loss(X, proxies, T, scale)

    # f32 MXU / f32 streaming: tight check against the faithful reference.
    loss_f32 = proxynca_prob_orig_softlabel_loss(X, proxies, T, scale,
                                                 mxu_dtype=jnp.float32)
    jax.block_until_ready(loss_f32)
    assert jnp.allclose(loss_f32, ref, atol=1e-4, rtol=1e-4), (loss_f32, ref)

    # Default bf16 MXU operands + bf16 X/T streaming (v6e/v7x-native); looser tol.
    loss_bf16 = proxynca_prob_orig_softlabel_loss(X, proxies, T, scale)
    jax.block_until_ready(loss_bf16)
    assert jnp.allclose(loss_bf16, ref, atol=1e-1, rtol=5e-2), (loss_bf16, ref)

    print("KERNEL_OK")
</pallas_src>

<mosaic_0001>
module attributes {stable_mosaic.version = 11 : i64} {
  func.func @_proxynca_kernel(%arg0: i32, %arg1: memref<8x128xf32, #tpu.memory_space<vmem>>, %arg2: memref<128x128xf32, #tpu.memory_space<vmem>>, %arg3: memref<8x128xf32, #tpu.memory_space<vmem>>, %arg4: memref<1x128xf32, #tpu.memory_space<vmem>>, %arg5: memref<8x128xf32, #tpu.memory_space<vmem>>) attributes {dimension_semantics = [#tpu.dimension_semantics<parallel>], iteration_bounds = array<i64: 1>, scalar_prefetch = 0 : i64, scratch_operands = 0 : i64, tpu.core_type = #tpu.core_type<tc>, window_params = [{transform_indices = @transform_0, window_bounds = array<i64: 8, 128>}, {pipeline_mode = #tpu.pipeline_mode<synchronous>, transform_indices = @transform_1, window_bounds = array<i64: 128, 128>}, {transform_indices = @transform_2, window_bounds = array<i64: 8, 128>}, {pipeline_mode = #tpu.pipeline_mode<synchronous>, transform_indices = @transform_3, window_bounds = array<i64: 1, 128>}, {transform_indices = @transform_4, window_bounds = array<i64: 8, 128>}]} {
    %c0 = arith.constant 0 : index
    %c0_0 = arith.constant 0 : index
    %0 = vector.load %arg1[%c0, %c0_0] : memref<8x128xf32, #tpu.memory_space<vmem>>, vector<8x128xf32>
    %1 = arith.mulf %0, %0 : vector<8x128xf32>
    %cst = arith.constant dense<0.000000e+00> : vector<8xf32>
    %2 = vector.multi_reduction <add>, %1, %cst [1] : vector<8x128xf32> to vector<8xf32>
    %3 = vector.shape_cast %2 : vector<8xf32> to vector<8x1xf32>
    %cst_1 = arith.constant 1.000000e-24 : f32
    %4 = vector.broadcast %cst_1 : f32 to vector<8x1xf32>
    %5 = arith.maximumf %3, %4 : vector<8x1xf32>
    %6 = math.rsqrt %5 : vector<8x1xf32>
    %cst_2 = arith.constant 6.000000e+00 : f32
    %7 = vector.broadcast %cst_2 : f32 to vector<8x1xf32>
    %8 = arith.mulf %7, %6 : vector<8x1xf32>
    %9 = vector.broadcast %8 : vector<8x1xf32> to vector<8x128xf32>
    %10 = arith.mulf %0, %9 : vector<8x128xf32>
    %c0_3 = arith.constant 0 : index
    %c0_4 = arith.constant 0 : index
    %11 = vector.load %arg2[%c0_3, %c0_4] : memref<128x128xf32, #tpu.memory_space<vmem>>, vector<128x128xf32>
    %cst_5 = arith.constant dense<0.000000e+00> : vector<8x128xf32>
    %12 = tpu.matmul %10, %11, %cst_5 {dimension_numbers = #tpu.dot_dimension_numbers<[1], [0], [0], [1], [0, 0, 1, 1], [], []>} : vector<8x128xf32>, vector<128x128xf32>, vector<8x128xf32> -> vector<8x128xf32>
    %c0_6 = arith.constant 0 : index
    %c0_7 = arith.constant 0 : index
    %13 = vector.load %arg4[%c0_6, %c0_7] : memref<1x128xf32, #tpu.memory_space<vmem>>, vector<1x128xf32>
    %14 = vector.broadcast %13 : vector<1x128xf32> to vector<8x128xf32>
    %15 = arith.addf %12, %14 : vector<8x128xf32>
    %c0_8 = arith.constant 0 : index
    %c0_9 = arith.constant 0 : index
    %16 = vector.load %arg3[%c0_8, %c0_9] : memref<8x128xf32, #tpu.memory_space<vmem>>, vector<8x128xf32>
    %cst_10 = arith.constant dense<0xFF800000> : vector<8xf32>
    %17 = vector.multi_reduction <maximumf>, %15, %cst_10 [1] : vector<8x128xf32> to vector<8xf32>
    %18 = vector.shape_cast %17 : vector<8xf32> to vector<8x1xf32>
    %19 = vector.broadcast %18 : vector<8x1xf32> to vector<8x128xf32>
    %20 = arith.subf %15, %19 : vector<8x128xf32>
    %21 = math.exp %20 : vector<8x128xf32>
    %cst_11 = arith.constant dense<0.000000e+00> : vector<8xf32>
    %22 = vector.multi_reduction <add>, %21, %cst_11 [1] : vector<8x128xf32> to vector<8xf32>
    %23 = vector.shape_cast %22 : vector<8xf32> to vector<8x1xf32>
    %24 = math.log %23 : vector<8x1xf32>
    %25 = arith.addf %18, %24 : vector<8x1xf32>
    %cst_12 = arith.constant dense<0.000000e+00> : vector<8xf32>
    %26 = vector.multi_reduction <add>, %16, %cst_12 [1] : vector<8x128xf32> to vector<8xf32>
    %27 = vector.shape_cast %26 : vector<8xf32> to vector<8x1xf32>
    %28 = arith.mulf %16, %15 : vector<8x128xf32>
    %cst_13 = arith.constant dense<0.000000e+00> : vector<8xf32>
    %29 = vector.multi_reduction <add>, %28, %cst_13 [1] : vector<8x128xf32> to vector<8xf32>
    %30 = vector.shape_cast %29 : vector<8xf32> to vector<8x1xf32>
    %31 = arith.mulf %25, %27 : vector<8x1xf32>
    %32 = arith.subf %31, %30 : vector<8x1xf32>
    %33 = vector.shape_cast %32 : vector<8x1xf32> to vector<8x1xf32>
    %34 = vector.broadcast %33 : vector<8x1xf32> to vector<8x128xf32>
    %c0_14 = arith.constant 0 : index
    %c0_15 = arith.constant 0 : index
    %35 = vector.load %arg5[%c0_14, %c0_15] : memref<8x128xf32, #tpu.memory_space<vmem>>, vector<8x128xf32>
    tpu.vector_store %arg5[%c0_14, %c0_15], %34 {strides = array<i32>} : memref<8x128xf32, #tpu.memory_space<vmem>>, vector<8x128xf32>,
    return
  }
  func.func @transform_0(%arg0: i32) -> (i32, i32) {
    %c0_i32 = arith.constant 0 : i32
    %c0_i32_0 = arith.constant 0 : i32
    return %arg0, %c0_i32 : i32, i32
  }
  func.func @transform_1(%arg0: i32) -> (i32, i32) {
    %c0_i32 = arith.constant 0 : i32
    %c0_i32_0 = arith.constant 0 : i32
    %c0_i32_1 = arith.constant 0 : i32
    return %c0_i32, %c0_i32_0 : i32, i32
  }
  func.func @transform_2(%arg0: i32) -> (i32, i32) {
    %c0_i32 = arith.constant 0 : i32
    %c0_i32_0 = arith.constant 0 : i32
    return %arg0, %c0_i32 : i32, i32
  }
  func.func @transform_3(%arg0: i32) -> (i32, i32) {
    %c0_i32 = arith.constant 0 : i32
    %c0_i32_0 = arith.constant 0 : i32
    %c0_i32_1 = arith.constant 0 : i32
    return %c0_i32, %c0_i32_0 : i32, i32
  }
  func.func @transform_4(%arg0: i32) -> (i32, i32) {
    %c0_i32 = arith.constant 0 : i32
    %c0_i32_0 = arith.constant 0 : i32
    return %arg0, %c0_i32 : i32, i32
  }
}

</mosaic_0001>

<llo_original>
// kernel: tpu_custom_call.1
$region0: #{tpu_custom_call.1}
  #allocation0 [shape = 'u32[]', space=smem, size = 0x4, offset = 0x4, fixed_abs, tag = 'smem constant byte address 0x4 - core index']
  #allocation1 [shape = 'u32[144,128]{1,0:T(1,128)}', space=vmem, size = 0x12000, scoped, tag = 'internal scratch']
  %s0 = inlined_call_operand.hbm [shape: f32[8,128], index: 0, kind: input, shape index: {}]
  %s1 = inlined_call_operand.hbm [shape: f32[128,128], index: 1, kind: input, shape index: {}]
  %s2 = inlined_call_operand.hbm [shape: f32[8,128], index: 2, kind: input, shape index: {}]
  %s3 = inlined_call_operand.vmem [shape: f32[1,128], index: 3, kind: input, shape index: {}]
  %s4 = inlined_call_operand.hbm [shape: f32[8,128], index: 4, kind: output, shape index: {}]
  %s5 = sld [smem:[#allocation0]]
  $region38: #{tpu_custom_call.1} parent=0
    _
  %s7 = ssub.s32 1, %s5
  %s8 = scalar_select 0, %s7, %s5
  $region1: #{tpu_custom_call.1} parent=0
    #allocation2 [shape = 'u8[4096]{0}', space=vmem, size = 0x1000, scoped, tag = 'input window, operand 0, single buffered']
    #allocation3 [shape = 's32[1]{0}', space=sflag, size = 0x4, scoped, tag = 'scoped memory for tpu_custom_call.1']
    #allocation4 [shape = 's32[1]{0}', space=sflag, size = 0x4, scoped, tag = 'scoped memory for tpu_custom_call.1']
    #allocation5 [shape = 'u8[65536]{0}', space=vmem, size = 0x10000, scoped, tag = 'input window, operand 1, single buffered']
    #allocation6 [shape = 's32[1]{0}', space=sflag, size = 0x4, scoped, tag = 'scoped memory for tpu_custom_call.1']
    #allocation7 [shape = 'u8[4096]{0}', space=vmem, size = 0x1000, scoped, tag = 'input window, operand 2, single buffered']
    #allocation8 [shape = 'u8[4096]{0}', space=vmem, size = 0x1000, scoped, tag = 'output window, operand 0, single buffered']
    %9 = vsyncpa [#allocation3], 0
    %10 = vsyncpa [#allocation6], 0
    %11 = vsyncpa [#allocation4], 0
    // Predicated region
    $region2: #{tpu_custom_call.1} parent=1 // pred_check
      _
    $region3: #{tpu_custom_call.1} parent=1 // pred_check_branch
      %13 = sbr.rel (0) target = $region5
    $region4: #{tpu_custom_call.1} parent=1 // pred_region
      %s15 = ssub.s32 128, 128
      %16 = vsyncadd [#allocation3], %s15
      %s18 = sshll.u32 [#allocation2], 4
      %s19 = int_to_ptr.vmem [resolvable:$true] %s18
      %21 = dma.hbm_to_vmem [thread:$0]  %s0, 128, %s19, [#allocation3]
    $region5: #{tpu_custom_call.1} parent=1 // pred_fallthru
      _
    // Predicated region
    $region6: #{tpu_custom_call.1} parent=1 // pred_check
      _
    $region7: #{tpu_custom_call.1} parent=1 // pred_check_branch
      %23 = sbr.rel (0) target = $region9
    $region8: #{tpu_custom_call.1} parent=1 // pred_region
      %s25 = ssub.s32 2048, 2048
      %26 = vsyncadd [#allocation6], %s25
      %s27 = sshll.u32 [#allocation5], 4
      %s28 = int_to_ptr.vmem [resolvable:$true] %s27
      %33 = dma.hbm_to_vmem [thread:$0]  %s1, 2048, %s28, [#allocation6], 128, 128, 8
    $region9: #{tpu_custom_call.1} parent=1 // pred_fallthru
      _
    // Predicated region
    $region10: #{tpu_custom_call.1} parent=1 // pred_check
      _
    $region11: #{tpu_custom_call.1} parent=1 // pred_check_branch
      %35 = sbr.rel (0) target = $region13
    $region12: #{tpu_custom_call.1} parent=1 // pred_region
      %s37 = ssub.s32 128, 128
      %38 = vsyncadd [#allocation6], %s37
      %s40 = sshll.u32 [#allocation7], 4
      %s41 = int_to_ptr.vmem [resolvable:$true] %s40
      %43 = dma.hbm_to_vmem [thread:$0]  %s2, 128, %s41, [#allocation6]
    $region13: #{tpu_custom_call.1} parent=1 // pred_fallthru
      _
    // Predicated region
    $region14: #{tpu_custom_call.1} parent=1 // pred_check
      _
    $region15: #{tpu_custom_call.1} parent=1 // pred_check_branch
      %45 = sbr.rel (0) target = $region17
    $region16: #{tpu_custom_call.1} parent=1 // pred_region
      _
    $region17: #{tpu_custom_call.1} parent=1 // pred_fallthru
      _
    // Predicated region
    $region18: #{tpu_custom_call.1} parent=1 // pred_check
      _
    $region19: #{tpu_custom_call.1} parent=1 // pred_check_branch
      %47 = sbr.rel (0) target = $region21
    $region20: #{tpu_custom_call.1} parent=1 // pred_region
      %48 = dma.done [#allocation3], 128
    $region21: #{tpu_custom_call.1} parent=1 // pred_fallthru
      _
    // Predicated region
    $region22: #{tpu_custom_call.1} parent=1 // pred_check
      _
    $region23: #{tpu_custom_call.1} parent=1 // pred_check_branch
      %50 = sbr.rel (0) target = $region25
    $region24: #{tpu_custom_call.1} parent=1 // pred_region
      %51 = dma.done [#allocation6], 2048
    $region25: #{tpu_custom_call.1} parent=1 // pred_fallthru
      _
    // Predicated region
    $region26: #{tpu_custom_call.1} parent=1 // pred_check
      _
    $region27: #{tpu_custom_call.1} parent=1 // pred_check_branch
      %53 = sbr.rel (0) target = $region29
    $region28: #{tpu_custom_call.1} parent=1 // pred_region
      %54 = dma.done [#allocation6], 128
    $region29: #{tpu_custom_call.1} parent=1 // pred_fallthru
      _
    %v55 = vld [vmem:[#allocation2] sm:$0xff]
    %v56 = vmul.f32 %v55, %v55
    %57 = vadd.xlane.f32.xlu0 %v56
    %v58 = vpop.xlane.xlu0 %57
    %v59 = vmax.f32 %v58, 1e-24
    %v60 = vrsqrt.pop %v59
    %v61 = vmul.f32 %v60, 6.0
    %v62 = vmul.f32 %v55, %v61
    %v63 = vld [vmem:[#allocation5] sm:$0xff]
    %v64 = vld [vmem:[#allocation5 + $0x8] sm:$0xff]
    %v65 = vld [vmem:[#allocation5 + $0x10] sm:$0xff]
    %v66 = vld [vmem:[#allocation5 + $0x18] sm:$0xff]
    %v67 = vld [vmem:[#allocation5 + $0x20] sm:$0xff]
    %v68 = vld [vmem:[#allocation5 + $0x28] sm:$0xff]
    %v69 = vld [vmem:[#allocation5 + $0x30] sm:$0xff]
    %v70 = vld [vmem:[#allocation5 + $0x38] sm:$0xff]
    %v71 = vld [vmem:[#allocation5 + $0x40] sm:$0xff]
    %v72 = vld [vmem:[#allocation5 + $0x48] sm:$0xff]
    %v73 = vld [vmem:[#allocation5 + $0x50] sm:$0xff]
    %v74 = vld [vmem:[#allocation5 + $0x58] sm:$0xff]
    %v75 = vld [vmem:[#allocation5 + $0x60] sm:$0xff]
    %v76 = vld [vmem:[#allocation5 + $0x68] sm:$0xff]
    %v77 = vld [vmem:[#allocation5 + $0x70] sm:$0xff]
    %v78 = vld [vmem:[#allocation5 + $0x78] sm:$0xff]
    %v79 = vld [vmem:[%s3] sm:$0x1]
    %v81 = vlaneseq
    %v82 = vshrl.u32 %v81, 7
    %v83 = vsub.s32 0, %v82
    %v84 = vrot.slane %v79, %v83
    %86 = vmatprep.subr.mxu0 0.0
    %87 = vmatpush1.msra.mxu0 %v63
    %88 = vmatprep.subr.mxu0 0.0
    %89 = vmatpush1.msra.mxu0 %v64
    %90 = vmatprep.subr.mxu0 0.0
    %91 = vmatpush1.msra.mxu0 %v65
    %92 = vmatprep.subr.mxu0 0.0
    %93 = vmatpush1.msra.mxu0 %v66
    %94 = vmatprep.subr.mxu0 0.0
    %95 = vmatpush1.msra.mxu0 %v67
    %96 = vmatprep.subr.mxu0 0.0
    %97 = vmatpush1.msra.mxu0 %v68
    %98 = vmatprep.subr.mxu0 0.0
    %99 = vmatpush1.msra.mxu0 %v69
    %100 = vmatprep.subr.mxu0 0.0
    %101 = vmatpush1.msra.mxu0 %v70
    %102 = vmatprep.subr.mxu0 0.0
    %103 = vmatpush1.msra.mxu0 %v71
    %104 = vmatprep.subr.mxu0 0.0
    %105 = vmatpush1.msra.mxu0 %v72
    %106 = vmatprep.subr.mxu0 0.0
    %107 = vmatpush1.msra.mxu0 %v73
    %108 = vmatprep.subr.mxu0 0.0
    %109 = vmatpush1.msra.mxu0 %v74
    %110 = vmatprep.subr.mxu0 0.0
    %111 = vmatpush1.msra.mxu0 %v75
    %112 = vmatprep.subr.mxu0 0.0
    %113 = vmatpush1.msra.mxu0 %v76
    %114 = vmatprep.subr.mxu0 0.0
    %115 = vmatpush1.msra.mxu0 %v77
    %116 = vmatprep.subr.mxu0 0.0
    %117 = vmatpush1.msra.mxu0 %v78
    %118 = vmatprep.subr.mxu0 0.0
    %119 = vmatpush1.msra.mxu0 0.0
    %120 = vmatprep.subr.mxu0 0.0
    %121 = vmatpush1.msra.mxu0 0.0
    %122 = vmatprep.subr.mxu0 0.0
    %123 = vmatpush1.msra.mxu0 0.0
    %124 = vmatprep.subr.mxu0 0.0
    %125 = vmatpush1.msra.mxu0 0.0
    %126 = vmatprep.subr.mxu0 0.0
    %127 = vmatpush1.msra.mxu0 0.0
    %128 = vmatprep.subr.mxu0 0.0
    %129 = vmatpush1.msra.mxu0 0.0
    %130 = vmatprep.subr.mxu0 0.0
    %131 = vmatpush1.msra.mxu0 0.0
    %132 = vmatprep.subr.mxu0 0.0
    %133 = vmatpush1.msra.mxu0 0.0
    %134 = vmatprep.subr.mxu0 0.0
    %135 = vmatpush1.msra.mxu0 0.0
    %136 = vmatprep.subr.mxu0 0.0
    %137 = vmatpush1.msra.mxu0 0.0
    %138 = vmatprep.subr.mxu0 0.0
    %139 = vmatpush1.msra.mxu0 0.0
    %140 = vmatprep.subr.mxu0 0.0
    %141 = vmatpush1.msra.mxu0 0.0
    %142 = vmatprep.subr.mxu0 0.0
    %143 = vmatpush1.msra.mxu0 0.0
    %144 = vmatprep.subr.mxu0 0.0
    %145 = vmatpush1.msra.mxu0 0.0
    %146 = vmatprep.subr.mxu0 0.0
    %147 = vmatpush1.msra.mxu0 0.0
    %148 = vmatprep.subr.mxu0 0.0
    %149 = vmatpush1.msra.mxu0 0.0
    %150 = vmatprep.mubr.f32.mxu0 0.0
    %151 = vmatmul.mubr.f32.gmra.mrb[0].mxu0 %v62
    %v152 = vpop.f32.mrb[0].mxu0
    %v153 = vadd.f32 %v84, %v152
    %v154 = vpop.f32.mrb[0].mxu0
    %155 = vdwg.mxu0
    %v156 = vld [vmem:[#allocation7] sm:$0xff]
    %157 = vmax.xlane.f32.xlu0 %v153
    %v158 = vpop.xlane.xlu0 %157
    %v159 = vsub.f32 %v153, %v158
    %v160 = vmul.f32 %v159, 1.442695
    %v161 = vpow.pop %v160
    %162 = vadd.xlane.f32.xlu0 %v161
    %v163 = vpop.xlane.xlu0 %162
    %v164 = vlog2.pop %v163
    %v165 = vmul.f32 %v164, 0.6931472
    %v166 = vadd.f32 %v158, %v165
    %167 = vadd.xlane.f32.xlu0 %v156
    %v168 = vpop.xlane.xlu0 %167
    %v169 = vmul.f32 %v156, %v153
    %170 = vadd.xlane.f32.xlu0 %v169
    %v171 = vpop.xlane.xlu0 %170
    %v172 = vmul.f32 %v166, %v168
    %v173 = vsub.f32 %v172, %v171
    %174 = vst [vmem:[#allocation8] sm:$0xff] %v173
    // Predicated region
    $region30: #{tpu_custom_call.1} parent=1 // pred_check
      _
    $region31: #{tpu_custom_call.1} parent=1 // pred_check_branch
      %176 = sbr.rel (0) target = $region33
    $region32: #{tpu_custom_call.1} parent=1 // pred_region
      %s178 = ssub.s32 128, 128
      %179 = vsyncadd [#allocation4], %s178
      %s181 = sshll.u32 [#allocation8], 4
      %s182 = int_to_ptr.vmem [resolvable:$true] %s181
      %184 = dma.vmem_to_hbm [thread:$0]  %s182, 128, %s4, [#allocation4]
    $region33: #{tpu_custom_call.1} parent=1 // pred_fallthru
      _
    // Predicated region
    $region34: #{tpu_custom_call.1} parent=1 // pred_check
      _
    $region35: #{tpu_custom_call.1} parent=1 // pred_check_branch
      %186 = sbr.rel (0) target = $region37
    $region36: #{tpu_custom_call.1} parent=1 // pred_region
      %187 = dma.done [#allocation4], 128
    $region37: #{tpu_custom_call.1} parent=1 // pred_fallthru
      _
    %188 = vsyncpa [#allocation3], 1
    %189 = vsyncpa [#allocation6], 1
    %190 = vsyncpa [#allocation4], 1

</llo_original>
